<compile_context>
chip_gen: v7x
topology: tpu7x:2x2x1
jax: 0.10.0
libtpu: 0.0.40
codegen_flags: <defaults>
</compile_context>

<pallas_src>
import jax
import jax.numpy as jnp
from jax.experimental import pallas as pl
from jax.experimental.pallas import tpu as pltpu


def _seghead_kernel(x_ref, w_ref, o_ref):
    # x_ref: (Cin_f, TM)    -- pixels on lanes, (folded) channels on sublanes
    # w_ref: (Cout_f, Cin_f)-- tiny, constant across the grid (stays resident)
    # o_ref: (Cout_f, TM)
    o_ref[...] = jnp.dot(
        w_ref[...],
        x_ref[...],
        preferred_element_type=jnp.float32,
        precision=jax.lax.Precision.HIGHEST,  # K is tiny; keep f32 parity with reference
    ).astype(o_ref.dtype)


def _round_down(x: int, m: int) -> int:
    return max(m, (x // m) * m)


def _pad8(c: int) -> int:
    return ((c + 7) // 8) * 8


def _vmem_capacity_bytes() -> int:
    try:
        info = pltpu.get_tpu_info()
        cap = getattr(info, "vmem_capacity_bytes", None)
        if cap:
            return int(cap)
    except Exception:
        pass
    return 64 << 20  # conservative fallback (v7x per-TensorCore VMEM)


def _pick_vmem_limit() -> int:
    # v5e/v6e (128 MiB physical) -> 96 MiB scoped; v7x (64 MiB) -> 48 MiB scoped.
    return int(min(96 << 20, (_vmem_capacity_bytes() * 3) // 4))


def _pick_spatial_tile(hw_pad: int, cin_f: int, cout_f: int, vmem_limit: int) -> int:
    # Double-buffered per-step working set ~= 2 buffers * 4 B * TM * (pad8(cin)+pad8(cout)).
    bytes_per_lane = 2 * 4 * (_pad8(cin_f) + _pad8(cout_f))
    budget = vmem_limit // 2  # headroom for weight block, compiler scratch, etc.
    tm_cap = min(budget // bytes_per_lane, 131072)
    tm_cap = _round_down(tm_cap, 1024) if tm_cap >= 2048 else _round_down(tm_cap, 128)
    tm = min(tm_cap, hw_pad)
    tm = _round_down(tm, 1024) if tm >= 2048 else _round_down(tm, 128)
    return tm


def seghead_forward(x_nchw, weight):
    """SegHead forward: 1x1 conv, stride 1, padding 0, no bias, no BN/ReLU.

    x_nchw : (N, Cin, H, W) float32
    weight : (Cout, Cin, 1, 1) float32 (PyTorch Conv2d weight layout)
    returns: (N, Cout, H, W) float32
    """
    N, Cin, H, W = x_nchw.shape
    Cout = weight.shape[0]
    HW = H * W
    orig_dtype = x_nchw.dtype

    # --- Fold consecutive batch images into the channel axis to fill the f32
    # (8,128) sublane tile (Cin=4 alone wastes half of every input vreg/DMA).
    fold = 1
    for f in (8, 4, 2):
        if N % f == 0 and f * Cin <= 8:
            fold = f
            break
    Ng = N // fold
    Cin_f = Cin * fold
    Cout_f = Cout * fold

    w_mat = weight.reshape(Cout, Cin).astype(jnp.float32)
    if fold > 1:
        # Block-diagonal (Cout_f, Cin_f): block (i,i) = W, zeros elsewhere.
        w_big = jnp.kron(jnp.eye(fold, dtype=w_mat.dtype), w_mat)
    else:
        w_big = w_mat

    # --- Lane-dense spatial axis; pad once to a multiple of 128 so every block is
    # a legal full-width tile (no degenerate single-mega-block fallback).
    x3 = x_nchw.astype(jnp.float32).reshape(Ng, Cin_f, HW)
    HW_pad = ((HW + 127) // 128) * 128
    if HW_pad != HW:
        x3 = jnp.pad(x3, ((0, 0), (0, 0), (0, HW_pad - HW)))

    vmem_limit = _pick_vmem_limit()
    TM = _pick_spatial_tile(HW_pad, Cin_f, Cout_f, vmem_limit)

    # v7x megacore: keep >= 4 grid steps when possible so both TensorCores get work.
    while Ng * pl.cdiv(HW_pad, TM) < 4 and TM > 128:
        TM = _round_down(TM // 2, 128)

    grid = (Ng, pl.cdiv(HW_pad, TM))

    flops = 2 * N * HW * Cin * Cout
    bytes_accessed = (N * HW * (Cin + Cout) + Cin * Cout) * 4

    out3 = pl.pallas_call(
        _seghead_kernel,
        out_shape=jax.ShapeDtypeStruct((Ng, Cout_f, HW_pad), jnp.float32),
        grid=grid,
        in_specs=[
            # Batch-group dim squeezed out of the kernel view; spatial tiled on lanes.
            pl.BlockSpec((None, Cin_f, TM), lambda g, t: (g, 0, t)),
            # Weight block is constant across the grid (resident in VMEM).
            pl.BlockSpec((Cout_f, Cin_f), lambda g, t: (0, 0)),
        ],
        out_specs=pl.BlockSpec((None, Cout_f, TM), lambda g, t: (g, 0, t)),
        compiler_params=pltpu.CompilerParams(
            dimension_semantics=("parallel", "parallel"),
            vmem_limit_bytes=vmem_limit,
        ),
        cost_estimate=pl.CostEstimate(
            flops=flops, transcendentals=0, bytes_accessed=bytes_accessed
        ),
    )(x3, w_big)

    out3 = out3[:, :, :HW]
    return out3.reshape(N, Cout, H, W).astype(orig_dtype)


if __name__ == "__main__":
    key = jax.random.PRNGKey(0)
    kx, kw, kx2 = jax.random.split(key, 3)

    # SegHead(in_channels=4, out_channels=8) on a (2, 4, 16, 16) input.
    N, Cin, H, W = 2, 4, 16, 16
    Cout = 8

    x = jax.random.normal(kx, (N, Cin, H, W), dtype=jnp.float32)
    weight = jax.random.normal(kw, (Cout, Cin, 1, 1), dtype=jnp.float32) * 0.1

    out = jax.block_until_ready(seghead_forward(x, weight))

    ref = jnp.einsum(
        "nchw,oc->nohw", x, weight.reshape(Cout, Cin),
        precision=jax.lax.Precision.HIGHEST,
    )
    assert out.shape == (N, Cout, H, W)
    assert jnp.allclose(out, ref, atol=1e-5, rtol=1e-5)

    # Extra sanity check: non-128-divisible spatial size exercises the padding path.
    x2 = jax.random.normal(kx2, (N, Cin, 10, 13), dtype=jnp.float32)
    out2 = jax.block_until_ready(seghead_forward(x2, weight))
    ref2 = jnp.einsum(
        "nchw,oc->nohw", x2, weight.reshape(Cout, Cin),
        precision=jax.lax.Precision.HIGHEST,
    )
    assert out2.shape == (N, Cout, 10, 13)
    assert jnp.allclose(out2, ref2, atol=1e-5, rtol=1e-5)

    print("KERNEL_OK")
</pallas_src>

<mosaic_0001>
module attributes {stable_mosaic.version = 11 : i64} {
  func.func @_seghead_kernel(%arg0: i32, %arg1: i32, %arg2: memref<1x8x128xf32, #tpu.memory_space<vmem>>, %arg3: memref<16x8xf32, #tpu.memory_space<vmem>>, %arg4: memref<1x16x128xf32, #tpu.memory_space<vmem>>) attributes {dimension_semantics = [#tpu.dimension_semantics<parallel>, #tpu.dimension_semantics<parallel>], iteration_bounds = array<i64: 1, 2>, scalar_prefetch = 0 : i64, scratch_operands = 0 : i64, tpu.core_type = #tpu.core_type<tc>, window_params = [{transform_indices = @transform_0, window_bounds = array<i64: 1, 8, 128>}, {pipeline_mode = #tpu.pipeline_mode<synchronous>, transform_indices = @transform_1, window_bounds = array<i64: 16, 8>}, {transform_indices = @transform_2, window_bounds = array<i64: 1, 16, 128>}]} {
    %c0 = arith.constant 0 : index
    %c0_0 = arith.constant 0 : index
    %0 = vector.load %arg3[%c0, %c0_0] : memref<16x8xf32, #tpu.memory_space<vmem>>, vector<16x8xf32>
    %c0_1 = arith.constant 0 : index
    %c0_2 = arith.constant 0 : index
    %c0_3 = arith.constant 0 : index
    %1 = vector.load %arg2[%c0_1, %c0_2, %c0_3] : memref<1x8x128xf32, #tpu.memory_space<vmem>>, vector<1x8x128xf32>
    %2 = vector.shape_cast %1 : vector<1x8x128xf32> to vector<8x128xf32>
    %cst = arith.constant dense<0.000000e+00> : vector<16x128xf32>
    %3 = tpu.matmul %0, %2, %cst {dimension_numbers = #tpu.dot_dimension_numbers<[1], [0], [0], [1], [0, 0, 1, 1], [], []>, precision = #tpu.contract_precision<fp32>} : vector<16x8xf32>, vector<8x128xf32>, vector<16x128xf32> -> vector<16x128xf32>
    %c0_4 = arith.constant 0 : index
    %c0_5 = arith.constant 0 : index
    %c0_6 = arith.constant 0 : index
    %4 = vector.load %arg4[%c0_4, %c0_5, %c0_6] : memref<1x16x128xf32, #tpu.memory_space<vmem>>, vector<1x16x128xf32>
    %5 = vector.shape_cast %4 : vector<1x16x128xf32> to vector<16x128xf32>
    %6 = vector.shape_cast %3 : vector<16x128xf32> to vector<1x16x128xf32>
    tpu.vector_store %arg4[%c0_4, %c0_5, %c0_6], %6 {strides = array<i32>} : memref<1x16x128xf32, #tpu.memory_space<vmem>>, vector<1x16x128xf32>,
    return
  }
  func.func @transform_0(%arg0: i32, %arg1: i32) -> (i32, i32, i32) {
    %c0_i32 = arith.constant 0 : i32
    %c0_i32_0 = arith.constant 0 : i32
    return %arg0, %c0_i32, %arg1 : i32, i32, i32
  }
  func.func @transform_1(%arg0: i32, %arg1: i32) -> (i32, i32) {
    %c0_i32 = arith.constant 0 : i32
    %c0_i32_0 = arith.constant 0 : i32
    %c0_i32_1 = arith.constant 0 : i32
    return %c0_i32, %c0_i32_0 : i32, i32
  }
  func.func @transform_2(%arg0: i32, %arg1: i32) -> (i32, i32, i32) {
    %c0_i32 = arith.constant 0 : i32
    %c0_i32_0 = arith.constant 0 : i32
    return %arg0, %c0_i32, %arg1 : i32, i32, i32
  }
}

</mosaic_0001>

<llo_original>
// kernel: tpu_custom_call.1
$region0: #{tpu_custom_call.1}
  #allocation0 [shape = 'u32[]', space=smem, size = 0x4, offset = 0x4, fixed_abs, tag = 'smem constant byte address 0x4 - core index']
  #allocation1 [shape = 'u32[144,128]{1,0:T(1,128)}', space=vmem, size = 0x12000, scoped, tag = 'internal scratch']
  %s0 = inlined_call_operand.vmem [shape: f32[1,8,256], index: 0, kind: input, shape index: {}]
  %s1 = inlined_call_operand.vmem [shape: f32[16,8], index: 1, kind: input, shape index: {}]
  %s2 = inlined_call_operand.hbm [shape: f32[1,16,256], index: 2, kind: output, shape index: {}]
  %s3 = sld [smem:[#allocation0]]
  $region41: #{tpu_custom_call.1} parent=0
    _
  %s5 = ssub.s32 1, %s3
  %s6 = scalar_select 0, %s5, %s3
  $region1: #{tpu_custom_call.1} parent=0
    #allocation2 [shape = 'u8[16384]{0}', space=vmem, size = 0x4000, scoped, tag = 'output window, operand 0']
    #allocation3 [shape = 's32[2]{0}', space=sflag, size = 0x8, scoped, tag = 'scoped memory for tpu_custom_call.1']
    %7 = vsyncpa [#allocation3], 0
    %s8 = scalar_lea.sflag [#allocation3], 1
    %9 = vsyncpa %s8, 0
    loop: start=0, step=1, limit=4
    $region2: #{tpu_custom_call.1} parent=1 // loop_pre_header
      _
    $region3: #{tpu_custom_call.1} parent=1 // loop_header
      %s11 = sphi 0, %s15
      %p12 = scmp.ge.s32.totalorder %s11, 4
      %s18 = sphi 0, %s30
      %s19 = sphi 0, %s26
      %s20 = sphi 0, %s18
      %s21 = sphi 0, %s19
      %s22 = sphi 0, %s20
      %s23 = sphi 0, %s21
      %s35 = sphi 0, %s37
      %s38 = sphi 0, %s35
      %s39 = sphi 0, %s38
      %s55 = sphi 0, %s39
      %s59 = sphi 0, %s59
      %s61 = sphi 0, %s59
      %s62 = sphi 0, %s61
      %s76 = sphi 0, %s62
      %s84 = sphi 0, %s86
      %s87 = sphi 0, %s84
      %s88 = sphi 0, %s87
      %s104 = sphi 0, %s88
    $region4: #{tpu_custom_call.1} parent=1 // loop_header_branch
      %14 = sbr.rel (%p12) target = $region8
    $region5: #{tpu_custom_call.1} parent=1 // loop_body
      %s16 = ssub.s32 %s11, 1
      %s17 = ssub.s32 %s11, 2
      %s24 = sadd.s32 1, %s19
      %p25 = scmp.ge.s32.totalorder %s24, 2
      %s26 = scalar_select %p25, 0, %s24
      %s27 = sadd.s32 1, %s18
      %s28 = scalar_select %p25, %s27, %s18
      %p29 = scmp.ge.s32.totalorder %s28, 1
      %s30 = scalar_select %p29, 0, %s28
      %s31 = ssub.s32 %s18, %s30
      %s32 = ssub.s32 %s19, %s26
      %s33 = sor.u32 %s31, %s32
      %p34 = scmp.eq.s32.totalorder %s33, 0
      %s36 = sadd.s32 %s35, 1
      %s37 = scalar_select %p34, %s35, %s36
      %p40 = pneg %p34
      %p41 = scmp.eq.s32.totalorder %s11, 1
      %p42 = por %p40, %p41
      %p43 = scmp.ne.s32.totalorder %s35, %s38
      %p44 = scmp.eq.s32.totalorder %s11, 0
      %p45 = por %p43, %p44
      %p46 = scmp.ne.s32.totalorder %s35, %s38
      %p47 = scmp.eq.s32.totalorder %s16, 1
      %p48 = por %p46, %p47
      %p49 = scmp.ne.s32.totalorder %s38, %s39
      %p50 = scmp.eq.s32.totalorder %s16, 0
      %p51 = por %p49, %p50
      %p52 = scmp.ne.s32.totalorder %s38, %s39
      %p53 = scmp.eq.s32.totalorder %s17, 1
      %p54 = por %p52, %p53
      %p56 = scmp.ne.s32.totalorder %s39, %s55
      %p57 = scmp.eq.s32.totalorder %s17, 0
      %p58 = por %p56, %p57
      %s60 = sadd.s32 %s59, 1
      %p63 = scmp.eq.s32.totalorder %s11, 1
      %p64 = scmp.ne.s32.totalorder %s59, %s61
      %p65 = scmp.eq.s32.totalorder %s11, 0
      %p66 = por %p64, %p65
      %p67 = scmp.ne.s32.totalorder %s59, %s61
      %p68 = scmp.eq.s32.totalorder %s16, 1
      %p69 = por %p67, %p68
      %p70 = scmp.ne.s32.totalorder %s61, %s62
      %p71 = scmp.eq.s32.totalorder %s16, 0
      %p72 = por %p70, %p71
      %p73 = scmp.ne.s32.totalorder %s61, %s62
      %p74 = scmp.eq.s32.totalorder %s17, 1
      %p75 = por %p73, %p74
      %p77 = scmp.ne.s32.totalorder %s62, %s76
      %p78 = scmp.eq.s32.totalorder %s17, 0
      %p79 = por %p77, %p78
      %s80 = ssub.s32 %s18, %s30
      %s81 = ssub.s32 %s19, %s26
      %s82 = sor.u32 %s80, %s81
      %p83 = scmp.eq.s32.totalorder %s82, 0
      %s85 = sadd.s32 %s84, 1
      %s86 = scalar_select %p83, %s84, %s85
      %p89 = pneg %p83
      %p90 = scmp.eq.s32.totalorder %s11, 1
      %p91 = por %p89, %p90
      %p92 = scmp.ne.s32.totalorder %s84, %s87
      %p93 = scmp.eq.s32.totalorder %s11, 0
      %p94 = por %p92, %p93
      %p95 = scmp.ne.s32.totalorder %s84, %s87
      %p96 = scmp.eq.s32.totalorder %s16, 1
      %p97 = por %p95, %p96
      %p98 = scmp.ne.s32.totalorder %s87, %s88
      %p99 = scmp.eq.s32.totalorder %s16, 0
      %p100 = por %p98, %p99
      %p101 = scmp.ne.s32.totalorder %s87, %s88
      %p102 = scmp.eq.s32.totalorder %s17, 1
      %p103 = por %p101, %p102
      %p105 = scmp.ne.s32.totalorder %s88, %s104
      %p106 = scmp.eq.s32.totalorder %s17, 0
      %p107 = por %p105, %p106
      %p108 = scmp.le.s32.totalorder 1, %s11
      %p109 = scmp.lt.s32.totalorder %s11, 3
      %p110 = pnand %p108, %p109
      %p111 = pneg %p110
      // Predicated region
      $region9: #{tpu_custom_call.1} parent=5 // pred_check
        _
      $region10: #{tpu_custom_call.1} parent=5 // pred_check_branch
        %113 = sbr.rel (%p110) target = $region12
      $region11: #{tpu_custom_call.1} parent=5 // pred_region
        %s114 = ssub.s32 %s11, 1
        // Predicated region
        $region13: #{tpu_custom_call.1} parent=11 // pred_check
          %p115 = pneg %p72
        $region14: #{tpu_custom_call.1} parent=11 // pred_check_branch
          %117 = sbr.rel (%p115) target = $region16
        $region15: #{tpu_custom_call.1} parent=11 // pred_region
          _
        $region16: #{tpu_custom_call.1} parent=11 // pred_fallthru
          _
      $region12: #{tpu_custom_call.1} parent=5 // pred_fallthru
        _
      %p118 = scmp.lt.s32.totalorder %s11, 2
      // Predicated region
      $region17: #{tpu_custom_call.1} parent=5 // pred_check
        %p119 = pneg %p118
      $region18: #{tpu_custom_call.1} parent=5 // pred_check_branch
        %121 = sbr.rel (%p119) target = $region20
      $region19: #{tpu_custom_call.1} parent=5 // pred_region
        // Predicated region
        $region21: #{tpu_custom_call.1} parent=19 // pred_check
          %p122 = pneg %p45
        $region22: #{tpu_custom_call.1} parent=19 // pred_check_branch
          %124 = sbr.rel (%p122) target = $region24
        $region23: #{tpu_custom_call.1} parent=19 // pred_region
          %p125 = scmp.lt.s32.totalorder %s18, 0
          %s126 = scalar_select %p125, %s18, 0
          %p127 = scmp.lt.s32.totalorder %s19, 1
          %s128 = scalar_select %p127, %s19, 1
          %s129 = smul.addr %s126, 2
          %s130 = sadd.s32 %s128, %s129
          %s131 = smul.addr %s130, 8
          %s132 = scalar_lea.vmem %s0, %s131
        $region24: #{tpu_custom_call.1} parent=19 // pred_fallthru
          _
      $region20: #{tpu_custom_call.1} parent=5 // pred_fallthru
        _
      %p133 = scmp.le.s32.totalorder 1, %s11
      %p134 = scmp.lt.s32.totalorder %s11, 3
      %p135 = pnand %p133, %p134
      %p136 = pneg %p135
      // Predicated region
      $region25: #{tpu_custom_call.1} parent=5 // pred_check
        _
      $region26: #{tpu_custom_call.1} parent=5 // pred_check_branch
        %138 = sbr.rel (%p135) target = $region28
      $region27: #{tpu_custom_call.1} parent=5 // pred_region
        %s139 = ssub.s32 %s11, 1
        %p140 = scmp.lt.s32.totalorder %s20, 0
        %s141 = scalar_select %p140, %s20, 0
        %p142 = scmp.lt.s32.totalorder %s21, 1
        %s143 = scalar_select %p142, %s21, 1
        %s144 = smul.addr %s141, 2
        %s145 = sadd.s32 %s143, %s144
        %s146 = smul.addr %s145, 8
        %s147 = scalar_lea.vmem %s0, %s146
        %p148 = pneg %p51
        %p149 = pneg %p48
        %p150 = pneg %p72
        %p151 = pneg %p69
        %p152 = pneg %p100
        %p153 = pneg %p97
        %s154 = sand.u32 %s87, 1
        %s155 = scalar_lea.sflag [#allocation3], %s154
        %s156 = sand.u32 %s87, 1
        %s157 = smul.addr %s156, 16
        %s158 = scalar_lea.vmem [#allocation2], %s157
        %p159 = scmp.lt.s32.totalorder %s20, 0
        %s160 = scalar_select %p159, %s20, 0
        %p161 = scmp.lt.s32.totalorder %s21, 1
        %s162 = scalar_select %p161, %s21, 1
        %s163 = smul.addr %s160, 2
        %s164 = sadd.s32 %s162, %s163
        %s165 = smul.addr %s164, 8
        %s166 = scalar_lea.vmem %s0, %s165
        %v167 = vld [vmem:[%s1] sm:$0xff]
        %v168 = vld [vmem:[%s1 + $0x8] sm:$0xff]
        %v169 = vld [vmem:[%s166] sm:$0xff]
        %vm170 = vcmask 64512
        %v172 = vsel %vm170, %v167, 0
        %v175 = vsel %vm170, %v168, 0
        %177 = vmatprep.subr.mxu0 0.0
        %v178 = vand.u32 %v169, 4294901760
        %179 = vmatpush1.msra.mxu0 %v178
        %180 = vmatprep.subr.mxu0 0.0
        %181 = vmatpush1.msra.mxu0 0.0
        %182 = vmatprep.subr.mxu0 0.0
        %183 = vmatpush1.msra.mxu0 0.0
        %184 = vmatprep.subr.mxu0 0.0
        %185 = vmatpush1.msra.mxu0 0.0
        %186 = vmatprep.subr.mxu0 0.0
        %187 = vmatpush1.msra.mxu0 0.0
        %188 = vmatprep.subr.mxu0 0.0
        %189 = vmatpush1.msra.mxu0 0.0
        %190 = vmatprep.subr.mxu0 0.0
        %191 = vmatpush1.msra.mxu0 0.0
        %192 = vmatprep.subr.mxu0 0.0
        %193 = vmatpush1.msra.mxu0 0.0
        %194 = vmatprep.subr.mxu0 0.0
        %195 = vmatpush1.msra.mxu0 0.0
        %196 = vmatprep.subr.mxu0 0.0
        %197 = vmatpush1.msra.mxu0 0.0
        %198 = vmatprep.subr.mxu0 0.0
        %199 = vmatpush1.msra.mxu0 0.0
        %200 = vmatprep.subr.mxu0 0.0
        %201 = vmatpush1.msra.mxu0 0.0
        %202 = vmatprep.subr.mxu0 0.0
        %203 = vmatpush1.msra.mxu0 0.0
        %204 = vmatprep.subr.mxu0 0.0
        %205 = vmatpush1.msra.mxu0 0.0
        %206 = vmatprep.subr.mxu0 0.0
        %207 = vmatpush1.msra.mxu0 0.0
        %208 = vmatprep.subr.mxu0 0.0
        %209 = vmatpush1.msra.mxu0 0.0
        %210 = vmatprep.subr.mxu0 0.0
        %211 = vmatpush1.msra.mxu0 0.0
        %212 = vmatprep.subr.mxu0 0.0
        %213 = vmatpush1.msra.mxu0 0.0
        %214 = vmatprep.subr.mxu0 0.0
        %215 = vmatpush1.msra.mxu0 0.0
        %216 = vmatprep.subr.mxu0 0.0
        %217 = vmatpush1.msra.mxu0 0.0
        %218 = vmatprep.subr.mxu0 0.0
        %219 = vmatpush1.msra.mxu0 0.0
        %220 = vmatprep.subr.mxu0 0.0
        %221 = vmatpush1.msra.mxu0 0.0
        %222 = vmatprep.subr.mxu0 0.0
        %223 = vmatpush1.msra.mxu0 0.0
        %224 = vmatprep.subr.mxu0 0.0
        %225 = vmatpush1.msra.mxu0 0.0
        %226 = vmatprep.subr.mxu0 0.0
        %227 = vmatpush1.msra.mxu0 0.0
        %228 = vmatprep.subr.mxu0 0.0
        %229 = vmatpush1.msra.mxu0 0.0
        %230 = vmatprep.subr.mxu0 0.0
        %231 = vmatpush1.msra.mxu0 0.0
        %232 = vmatprep.subr.mxu0 0.0
        %233 = vmatpush1.msra.mxu0 0.0
        %234 = vmatprep.subr.mxu0 0.0
        %235 = vmatpush1.msra.mxu0 0.0
        %236 = vmatprep.subr.mxu0 0.0
        %237 = vmatpush1.msra.mxu0 0.0
        %238 = vmatprep.subr.mxu0 0.0
        %239 = vmatpush1.msra.mxu0 0.0
        %240 = vmatprep.subr.mxu0 0.0
        %241 = vmatpush1.msra.mxu0 0.0
        %242 = vmatprep.mubr.f32.mxu0 0.0
        %v243 = vand.u32 %v172, 4294901760
        %v244 = vsub.f32 %v172, %v243
        %v245 = vand.u32 %v244, 4294901760
        %v246 = vsub.f32 %v244, %v245
        %v247 = vand.u32 %v246, 4294901760
        %248 = vmatmul.mubr.f32.gmra.mrb[0].mxu0 %v247
        %v249 = vpop.f32.mrb[0].mxu0
        %v250 = vadd.f32 0.0, %v249
        %v251 = vpop.f32.mrb[0].mxu0
        %252 = vmatprep.mubr.f32.mxu0 0.0
        %v253 = vand.u32 %v175, 4294901760
        %v254 = vsub.f32 %v175, %v253
        %v255 = vand.u32 %v254, 4294901760
        %v256 = vsub.f32 %v254, %v255
        %v257 = vand.u32 %v256, 4294901760
        %258 = vmatmul.mubr.f32.gmra.mrb[0].mxu0 %v257
        %v259 = vpop.f32.mrb[0].mxu0
        %v260 = vadd.f32 0.0, %v259
        %v261 = vpop.f32.mrb[0].mxu0
        %262 = vdwg.mxu0
        %263 = vmatprep.subr.mxu0 0.0
        %v264 = vand.u32 %v169, 4294901760
        %v265 = vsub.f32 %v169, %v264
        %v266 = vand.u32 %v265, 4294901760
        %v267 = vsub.f32 %v265, %v266
        %v268 = vand.u32 %v267, 4294901760
        %269 = vmatpush1.msra.mxu0 %v268
        %270 = vmatprep.subr.mxu0 0.0
        %271 = vmatpush1.msra.mxu0 0.0
        %272 = vmatprep.subr.mxu0 0.0
        %273 = vmatpush1.msra.mxu0 0.0
        %274 = vmatprep.subr.mxu0 0.0
        %275 = vmatpush1.msra.mxu0 0.0
        %276 = vmatprep.subr.mxu0 0.0
        %277 = vmatpush1.msra.mxu0 0.0
        %278 = vmatprep.subr.mxu0 0.0
        %279 = vmatpush1.msra.mxu0 0.0
        %280 = vmatprep.subr.mxu0 0.0
        %281 = vmatpush1.msra.mxu0 0.0
        %282 = vmatprep.subr.mxu0 0.0
        %283 = vmatpush1.msra.mxu0 0.0
        %284 = vmatprep.subr.mxu0 0.0
        %285 = vmatpush1.msra.mxu0 0.0
        %286 = vmatprep.subr.mxu0 0.0
        %287 = vmatpush1.msra.mxu0 0.0
        %288 = vmatprep.subr.mxu0 0.0
        %289 = vmatpush1.msra.mxu0 0.0
        %290 = vmatprep.subr.mxu0 0.0
        %291 = vmatpush1.msra.mxu0 0.0
        %292 = vmatprep.subr.mxu0 0.0
        %293 = vmatpush1.msra.mxu0 0.0
        %294 = vmatprep.subr.mxu0 0.0
        %295 = vmatpush1.msra.mxu0 0.0
        %296 = vmatprep.subr.mxu0 0.0
        %297 = vmatpush1.msra.mxu0 0.0
        %298 = vmatprep.subr.mxu0 0.0
        %299 = vmatpush1.msra.mxu0 0.0
        %300 = vmatprep.subr.mxu0 0.0
        %301 = vmatpush1.msra.mxu0 0.0
        %302 = vmatprep.subr.mxu0 0.0
        %303 = vmatpush1.msra.mxu0 0.0
        %304 = vmatprep.subr.mxu0 0.0
        %305 = vmatpush1.msra.mxu0 0.0
        %306 = vmatprep.subr.mxu0 0.0
        %307 = vmatpush1.msra.mxu0 0.0
        %308 = vmatprep.subr.mxu0 0.0
        %309 = vmatpush1.msra.mxu0 0.0
        %310 = vmatprep.subr.mxu0 0.0
        %311 = vmatpush1.msra.mxu0 0.0
        %312 = vmatprep.subr.mxu0 0.0
        %313 = vmatpush1.msra.mxu0 0.0
        %314 = vmatprep.subr.mxu0 0.0
        %315 = vmatpush1.msra.mxu0 0.0
        %316 = vmatprep.subr.mxu0 0.0
        %317 = vmatpush1.msra.mxu0 0.0
        %318 = vmatprep.subr.mxu0 0.0
        %319 = vmatpush1.msra.mxu0 0.0
        %320 = vmatprep.subr.mxu0 0.0
        %321 = vmatpush1.msra.mxu0 0.0
        %322 = vmatprep.subr.mxu0 0.0
        %323 = vmatpush1.msra.mxu0 0.0
        %324 = vmatprep.subr.mxu0 0.0
        %325 = vmatpush1.msra.mxu0 0.0
        %326 = vmatprep.subr.mxu0 0.0
        %327 = vmatpush1.msra.mxu0 0.0
        %328 = vmatprep.subr.mxu0 0.0
        %329 = vmatpush1.msra.mxu0 0.0
        %330 = vmatprep.subr.mxu0 0.0
        %331 = vmatpush1.msra.mxu0 0.0
        %332 = vmatprep.mubr.f32.mxu0 0.0
        %v333 = vand.u32 %v172, 4294901760
        %334 = vmatmul.mubr.f32.gmra.mrb[0].mxu0 %v333
        %v335 = vpop.f32.mrb[0].mxu0
        %v336 = vadd.f32 %v250, %v335
        %v337 = vpop.f32.mrb[0].mxu0
        %338 = vmatprep.mubr.f32.mxu0 0.0
        %v339 = vand.u32 %v175, 4294901760
        %340 = vmatmul.mubr.f32.gmra.mrb[0].mxu0 %v339
        %v341 = vpop.f32.mrb[0].mxu0
        %v342 = vadd.f32 %v260, %v341
        %v343 = vpop.f32.mrb[0].mxu0
        %344 = vdwg.mxu0
        %345 = vmatprep.subr.mxu0 0.0
        %v346 = vand.u32 %v169, 4294901760
        %v347 = vsub.f32 %v169, %v346
        %348 = vmatpush1.msra.mxu0 %v347
        %349 = vmatprep.subr.mxu0 0.0
        %350 = vmatpush1.msra.mxu0 0.0
        %351 = vmatprep.subr.mxu0 0.0
        %352 = vmatpush1.msra.mxu0 0.0
        %353 = vmatprep.subr.mxu0 0.0
        %354 = vmatpush1.msra.mxu0 0.0
        %355 = vmatprep.subr.mxu0 0.0
        %356 = vmatpush1.msra.mxu0 0.0
        %357 = vmatprep.subr.mxu0 0.0
        %358 = vmatpush1.msra.mxu0 0.0
        %359 = vmatprep.subr.mxu0 0.0
        %360 = vmatpush1.msra.mxu0 0.0
        %361 = vmatprep.subr.mxu0 0.0
        %362 = vmatpush1.msra.mxu0 0.0
        %363 = vmatprep.subr.mxu0 0.0
        %364 = vmatpush1.msra.mxu0 0.0
        %365 = vmatprep.subr.mxu0 0.0
        %366 = vmatpush1.msra.mxu0 0.0
        %367 = vmatprep.subr.mxu0 0.0
        %368 = vmatpush1.msra.mxu0 0.0
        %369 = vmatprep.subr.mxu0 0.0
        %370 = vmatpush1.msra.mxu0 0.0
        %371 = vmatprep.subr.mxu0 0.0
        %372 = vmatpush1.msra.mxu0 0.0
        %373 = vmatprep.subr.mxu0 0.0
        %374 = vmatpush1.msra.mxu0 0.0
        %375 = vmatprep.subr.mxu0 0.0
        %376 = vmatpush1.msra.mxu0 0.0
        %377 = vmatprep.subr.mxu0 0.0
        %378 = vmatpush1.msra.mxu0 0.0
        %379 = vmatprep.subr.mxu0 0.0
        %380 = vmatpush1.msra.mxu0 0.0
        %381 = vmatprep.subr.mxu0 0.0
        %382 = vmatpush1.msra.mxu0 0.0
        %383 = vmatprep.subr.mxu0 0.0
        %384 = vmatpush1.msra.mxu0 0.0
        %385 = vmatprep.subr.mxu0 0.0
        %386 = vmatpush1.msra.mxu0 0.0
        %387 = vmatprep.subr.mxu0 0.0
        %388 = vmatpush1.msra.mxu0 0.0
        %389 = vmatprep.subr.mxu0 0.0
        %390 = vmatpush1.msra.mxu0 0.0
        %391 = vmatprep.subr.mxu0 0.0
        %392 = vmatpush1.msra.mxu0 0.0
        %393 = vmatprep.subr.mxu0 0.0
        %394 = vmatpush1.msra.mxu0 0.0
        %395 = vmatprep.subr.mxu0 0.0
        %396 = vmatpush1.msra.mxu0 0.0
        %397 = vmatprep.subr.mxu0 0.0
        %398 = vmatpush1.msra.mxu0 0.0
        %399 = vmatprep.subr.mxu0 0.0
        %400 = vmatpush1.msra.mxu0 0.0
        %401 = vmatprep.subr.mxu0 0.0
        %402 = vmatpush1.msra.mxu0 0.0
        %403 = vmatprep.subr.mxu0 0.0
        %404 = vmatpush1.msra.mxu0 0.0
        %405 = vmatprep.subr.mxu0 0.0
        %406 = vmatpush1.msra.mxu0 0.0
        %407 = vmatprep.subr.mxu0 0.0
        %408 = vmatpush1.msra.mxu0 0.0
        %409 = vmatprep.subr.mxu0 0.0
        %410 = vmatpush1.msra.mxu0 0.0
        %411 = vmatprep.mubr.f32.mxu0 0.0
        %v412 = vand.u32 %v172, 4294901760
        %v413 = vsub.f32 %v172, %v412
        %414 = vmatmul.mubr.f32.gmra.mrb[0].mxu0 %v413
        %v415 = vpop.f32.mrb[0].mxu0
        %v416 = vadd.f32 %v336, %v415
        %v417 = vpop.f32.mrb[0].mxu0
        %418 = vmatprep.mubr.f32.mxu0 0.0
        %v419 = vand.u32 %v175, 4294901760
        %v420 = vsub.f32 %v175, %v419
        %421 = vmatmul.mubr.f32.gmra.mrb[0].mxu0 %v420
        %v422 = vpop.f32.mrb[0].mxu0
        %v423 = vadd.f32 %v342, %v422
        %v424 = vpop.f32.mrb[0].mxu0
        %425 = vdwg.mxu0
        %426 = vmatprep.subr.mxu0 0.0
        %v427 = vand.u32 %v169, 4294901760
        %428 = vmatpush1.msra.mxu0 %v427
        %429 = vmatprep.subr.mxu0 0.0
        %430 = vmatpush1.msra.mxu0 0.0
        %431 = vmatprep.subr.mxu0 0.0
        %432 = vmatpush1.msra.mxu0 0.0
        %433 = vmatprep.subr.mxu0 0.0
        %434 = vmatpush1.msra.mxu0 0.0
        %435 = vmatprep.subr.mxu0 0.0
        %436 = vmatpush1.msra.mxu0 0.0
        %437 = vmatprep.subr.mxu0 0.0
        %438 = vmatpush1.msra.mxu0 0.0
        %439 = vmatprep.subr.mxu0 0.0
        %440 = vmatpush1.msra.mxu0 0.0
        %441 = vmatprep.subr.mxu0 0.0
        %442 = vmatpush1.msra.mxu0 0.0
        %443 = vmatprep.subr.mxu0 0.0
        %444 = vmatpush1.msra.mxu0 0.0
        %445 = vmatprep.subr.mxu0 0.0
        %446 = vmatpush1.msra.mxu0 0.0
        %447 = vmatprep.subr.mxu0 0.0
        %448 = vmatpush1.msra.mxu0 0.0
        %449 = vmatprep.subr.mxu0 0.0
        %450 = vmatpush1.msra.mxu0 0.0
        %451 = vmatprep.subr.mxu0 0.0
        %452 = vmatpush1.msra.mxu0 0.0
        %453 = vmatprep.subr.mxu0 0.0
        %454 = vmatpush1.msra.mxu0 0.0
        %455 = vmatprep.subr.mxu0 0.0
        %456 = vmatpush1.msra.mxu0 0.0
        %457 = vmatprep.subr.mxu0 0.0
        %458 = vmatpush1.msra.mxu0 0.0
        %459 = vmatprep.subr.mxu0 0.0
        %460 = vmatpush1.msra.mxu0 0.0
        %461 = vmatprep.subr.mxu0 0.0
        %462 = vmatpush1.msra.mxu0 0.0
        %463 = vmatprep.subr.mxu0 0.0
        %464 = vmatpush1.msra.mxu0 0.0
        %465 = vmatprep.subr.mxu0 0.0
        %466 = vmatpush1.msra.mxu0 0.0
        %467 = vmatprep.subr.mxu0 0.0
        %468 = vmatpush1.msra.mxu0 0.0
        %469 = vmatprep.subr.mxu0 0.0
        %470 = vmatpush1.msra.mxu0 0.0
        %471 = vmatprep.subr.mxu0 0.0
        %472 = vmatpush1.msra.mxu0 0.0
        %473 = vmatprep.subr.mxu0 0.0
        %474 = vmatpush1.msra.mxu0 0.0
        %475 = vmatprep.subr.mxu0 0.0
        %476 = vmatpush1.msra.mxu0 0.0
        %477 = vmatprep.subr.mxu0 0.0
        %478 = vmatpush1.msra.mxu0 0.0
        %479 = vmatprep.subr.mxu0 0.0
        %480 = vmatpush1.msra.mxu0 0.0
        %481 = vmatprep.subr.mxu0 0.0
        %482 = vmatpush1.msra.mxu0 0.0
        %483 = vmatprep.subr.mxu0 0.0
        %484 = vmatpush1.msra.mxu0 0.0
        %485 = vmatprep.subr.mxu0 0.0
        %486 = vmatpush1.msra.mxu0 0.0
        %487 = vmatprep.subr.mxu0 0.0
        %488 = vmatpush1.msra.mxu0 0.0
        %489 = vmatprep.subr.mxu0 0.0
        %490 = vmatpush1.msra.mxu0 0.0
        %491 = vmatprep.mubr.f32.mxu0 0.0
        %v492 = vand.u32 %v172, 4294901760
        %v493 = vsub.f32 %v172, %v492
        %v494 = vand.u32 %v493, 4294901760
        %495 = vmatmul.mubr.f32.gmra.mrb[0].mxu0 %v494
        %v496 = vpop.f32.mrb[0].mxu0
        %v497 = vadd.f32 %v416, %v496
        %v498 = vpop.f32.mrb[0].mxu0
        %499 = vmatprep.mubr.f32.mxu0 0.0
        %v500 = vand.u32 %v175, 4294901760
        %v501 = vsub.f32 %v175, %v500
        %v502 = vand.u32 %v501, 4294901760
        %503 = vmatmul.mubr.f32.gmra.mrb[0].mxu0 %v502
        %v504 = vpop.f32.mrb[0].mxu0
        %v505 = vadd.f32 %v423, %v504
        %v506 = vpop.f32.mrb[0].mxu0
        %507 = vdwg.mxu0
        %508 = vmatprep.subr.mxu0 0.0
        %v509 = vand.u32 %v169, 4294901760
        %v510 = vsub.f32 %v169, %v509
        %v511 = vand.u32 %v510, 4294901760
        %512 = vmatpush1.msra.mxu0 %v511
        %513 = vmatprep.subr.mxu0 0.0
        %514 = vmatpush1.msra.mxu0 0.0
        %515 = vmatprep.subr.mxu0 0.0
        %516 = vmatpush1.msra.mxu0 0.0
        %517 = vmatprep.subr.mxu0 0.0
        %518 = vmatpush1.msra.mxu0 0.0
        %519 = vmatprep.subr.mxu0 0.0
        %520 = vmatpush1.msra.mxu0 0.0
        %521 = vmatprep.subr.mxu0 0.0
        %522 = vmatpush1.msra.mxu0 0.0
        %523 = vmatprep.subr.mxu0 0.0
        %524 = vmatpush1.msra.mxu0 0.0
        %525 = vmatprep.subr.mxu0 0.0
        %526 = vmatpush1.msra.mxu0 0.0
        %527 = vmatprep.subr.mxu0 0.0
        %528 = vmatpush1.msra.mxu0 0.0
        %529 = vmatprep.subr.mxu0 0.0
        %530 = vmatpush1.msra.mxu0 0.0
        %531 = vmatprep.subr.mxu0 0.0
        %532 = vmatpush1.msra.mxu0 0.0
        %533 = vmatprep.subr.mxu0 0.0
        %534 = vmatpush1.msra.mxu0 0.0
        %535 = vmatprep.subr.mxu0 0.0
        %536 = vmatpush1.msra.mxu0 0.0
        %537 = vmatprep.subr.mxu0 0.0
        %538 = vmatpush1.msra.mxu0 0.0
        %539 = vmatprep.subr.mxu0 0.0
        %540 = vmatpush1.msra.mxu0 0.0
        %541 = vmatprep.subr.mxu0 0.0
        %542 = vmatpush1.msra.mxu0 0.0
        %543 = vmatprep.subr.mxu0 0.0
        %544 = vmatpush1.msra.mxu0 0.0
        %545 = vmatprep.subr.mxu0 0.0
        %546 = vmatpush1.msra.mxu0 0.0
        %547 = vmatprep.subr.mxu0 0.0
        %548 = vmatpush1.msra.mxu0 0.0
        %549 = vmatprep.subr.mxu0 0.0
        %550 = vmatpush1.msra.mxu0 0.0
        %551 = vmatprep.subr.mxu0 0.0
        %552 = vmatpush1.msra.mxu0 0.0
        %553 = vmatprep.subr.mxu0 0.0
        %554 = vmatpush1.msra.mxu0 0.0
        %555 = vmatprep.subr.mxu0 0.0
        %556 = vmatpush1.msra.mxu0 0.0
        %557 = vmatprep.subr.mxu0 0.0
        %558 = vmatpush1.msra.mxu0 0.0
        %559 = vmatprep.subr.mxu0 0.0
        %560 = vmatpush1.msra.mxu0 0.0
        %561 = vmatprep.subr.mxu0 0.0
        %562 = vmatpush1.msra.mxu0 0.0
        %563 = vmatprep.subr.mxu0 0.0
        %564 = vmatpush1.msra.mxu0 0.0
        %565 = vmatprep.subr.mxu0 0.0
        %566 = vmatpush1.msra.mxu0 0.0
        %567 = vmatprep.subr.mxu0 0.0
        %568 = vmatpush1.msra.mxu0 0.0
        %569 = vmatprep.subr.mxu0 0.0
        %570 = vmatpush1.msra.mxu0 0.0
        %571 = vmatprep.subr.mxu0 0.0
        %572 = vmatpush1.msra.mxu0 0.0
        %573 = vmatprep.subr.mxu0 0.0
        %574 = vmatpush1.msra.mxu0 0.0
        %575 = vmatprep.mubr.f32.mxu0 0.0
        %v576 = vand.u32 %v172, 4294901760
        %577 = vmatmul.mubr.f32.gmra.mrb[0].mxu0 %v576
        %v578 = vpop.f32.mrb[0].mxu0
        %v579 = vadd.f32 %v497, %v578
        %v580 = vpop.f32.mrb[0].mxu0
        %581 = vmatprep.mubr.f32.mxu0 0.0
        %v582 = vand.u32 %v175, 4294901760
        %583 = vmatmul.mubr.f32.gmra.mrb[0].mxu0 %v582
        %v584 = vpop.f32.mrb[0].mxu0
        %v585 = vadd.f32 %v505, %v584
        %v586 = vpop.f32.mrb[0].mxu0
        %587 = vdwg.mxu0
        %588 = vmatprep.subr.mxu0 0.0
        %v589 = vand.u32 %v169, 4294901760
        %590 = vmatpush1.msra.mxu0 %v589
        %591 = vmatprep.subr.mxu0 0.0
        %592 = vmatpush1.msra.mxu0 0.0
        %593 = vmatprep.subr.mxu0 0.0
        %594 = vmatpush1.msra.mxu0 0.0
        %595 = vmatprep.subr.mxu0 0.0
        %596 = vmatpush1.msra.mxu0 0.0
        %597 = vmatprep.subr.mxu0 0.0
        %598 = vmatpush1.msra.mxu0 0.0
        %599 = vmatprep.subr.mxu0 0.0
        %600 = vmatpush1.msra.mxu0 0.0
        %601 = vmatprep.subr.mxu0 0.0
        %602 = vmatpush1.msra.mxu0 0.0
        %603 = vmatprep.subr.mxu0 0.0
        %604 = vmatpush1.msra.mxu0 0.0
        %605 = vmatprep.subr.mxu0 0.0
        %606 = vmatpush1.msra.mxu0 0.0
        %607 = vmatprep.subr.mxu0 0.0
        %608 = vmatpush1.msra.mxu0 0.0
        %609 = vmatprep.subr.mxu0 0.0
        %610 = vmatpush1.msra.mxu0 0.0
        %611 = vmatprep.subr.mxu0 0.0
        %612 = vmatpush1.msra.mxu0 0.0
        %613 = vmatprep.subr.mxu0 0.0
        %614 = vmatpush1.msra.mxu0 0.0
        %615 = vmatprep.subr.mxu0 0.0
        %616 = vmatpush1.msra.mxu0 0.0
        %617 = vmatprep.subr.mxu0 0.0
        %618 = vmatpush1.msra.mxu0 0.0
        %619 = vmatprep.subr.mxu0 0.0
        %620 = vmatpush1.msra.mxu0 0.0
        %621 = vmatprep.subr.mxu0 0.0
        %622 = vmatpush1.msra.mxu0 0.0
        %623 = vmatprep.subr.mxu0 0.0
        %624 = vmatpush1.msra.mxu0 0.0
        %625 = vmatprep.subr.mxu0 0.0
        %626 = vmatpush1.msra.mxu0 0.0
        %627 = vmatprep.subr.mxu0 0.0
        %628 = vmatpush1.msra.mxu0 0.0
        %629 = vmatprep.subr.mxu0 0.0
        %630 = vmatpush1.msra.mxu0 0.0
        %631 = vmatprep.subr.mxu0 0.0
        %632 = vmatpush1.msra.mxu0 0.0
        %633 = vmatprep.subr.mxu0 0.0
        %634 = vmatpush1.msra.mxu0 0.0
        %635 = vmatprep.subr.mxu0 0.0
        %636 = vmatpush1.msra.mxu0 0.0
        %637 = vmatprep.subr.mxu0 0.0
        %638 = vmatpush1.msra.mxu0 0.0
        %639 = vmatprep.subr.mxu0 0.0
        %640 = vmatpush1.msra.mxu0 0.0
        %641 = vmatprep.subr.mxu0 0.0
        %642 = vmatpush1.msra.mxu0 0.0
        %643 = vmatprep.subr.mxu0 0.0
        %644 = vmatpush1.msra.mxu0 0.0
        %645 = vmatprep.subr.mxu0 0.0
        %646 = vmatpush1.msra.mxu0 0.0
        %647 = vmatprep.subr.mxu0 0.0
        %648 = vmatpush1.msra.mxu0 0.0
        %649 = vmatprep.subr.mxu0 0.0
        %650 = vmatpush1.msra.mxu0 0.0
        %651 = vmatprep.subr.mxu0 0.0
        %652 = vmatpush1.msra.mxu0 0.0
        %653 = vmatprep.mubr.f32.mxu0 0.0
        %v654 = vand.u32 %v172, 4294901760
        %655 = vmatmul.mubr.f32.gmra.mrb[0].mxu0 %v654
        %v656 = vpop.f32.mrb[0].mxu0
        %v657 = vadd.f32 %v579, %v656
        %v658 = vpop.f32.mrb[0].mxu0
        %659 = vmatprep.mubr.f32.mxu0 0.0
        %v660 = vand.u32 %v175, 4294901760
        %661 = vmatmul.mubr.f32.gmra.mrb[0].mxu0 %v660
        %v662 = vpop.f32.mrb[0].mxu0
        %v663 = vadd.f32 %v585, %v662
        %v664 = vpop.f32.mrb[0].mxu0
        %665 = vdwg.mxu0
        %666 = vst [vmem:[%s158] sm:$0xff] %v657
        %667 = vst [vmem:[%s158 + $0x8] sm:$0xff] %v663
        %s668 = sand.u32 %s87, 1
        %s669 = scalar_lea.sflag [#allocation3], %s668
        %s670 = sand.u32 %s87, 1
        %s671 = smul.addr %s670, 16
        %s672 = scalar_lea.vmem [#allocation2], %s671
        // Predicated region
        $region29: #{tpu_custom_call.1} parent=27 // pred_check
          %p673 = pneg %p97
        $region30: #{tpu_custom_call.1} parent=27 // pred_check_branch
          %675 = sbr.rel (%p673) target = $region32
        $region31: #{tpu_custom_call.1} parent=27 // pred_region
          %s677 = ssub.s32 256, 256
          %678 = vsyncadd %s669, %s677
          %s679 = smul.addr %s20, 4
          %s680 = sadd.s32 %s21, %s679
          %s681 = smul.addr %s680, 128
          %s682 = scalar_lea.hbm %s2, %s681
          %s683 = sshll.u32 %s672, 4
          %s684 = int_to_ptr.vmem [resolvable:$true] %s683
          %689 = dma.vmem_to_hbm [thread:$0]  %s684, 256, %s682, %s669, 128, 256, 8
        $region32: #{tpu_custom_call.1} parent=27 // pred_fallthru
          _
      $region28: #{tpu_custom_call.1} parent=5 // pred_fallthru
        _
      %p690 = scmp.le.s32.totalorder 2, %s11
      // Predicated region
      $region33: #{tpu_custom_call.1} parent=5 // pred_check
        %p691 = pneg %p690
      $region34: #{tpu_custom_call.1} parent=5 // pred_check_branch
        %693 = sbr.rel (%p691) target = $region36
      $region35: #{tpu_custom_call.1} parent=5 // pred_region
        %s694 = ssub.s32 %s11, 2
        // Predicated region
        $region37: #{tpu_custom_call.1} parent=35 // pred_check
          %p695 = pneg %p103
        $region38: #{tpu_custom_call.1} parent=35 // pred_check_branch
          %697 = sbr.rel (%p695) target = $region40
        $region39: #{tpu_custom_call.1} parent=35 // pred_region
          %s698 = sand.u32 %s88, 1
          %s699 = scalar_lea.sflag [#allocation3], %s698
          %s700 = sand.u32 %s88, 1
          %s701 = smul.addr %s700, 16
          %s702 = scalar_lea.vmem [#allocation2], %s701
          %703 = dma.done %s699, 256
        $region40: #{tpu_custom_call.1} parent=35 // pred_fallthru
          _
      $region36: #{tpu_custom_call.1} parent=5 // pred_fallthru
        _
    $region6: #{tpu_custom_call.1} parent=1 // loop_footer
      %s15 = sadd.s32 1, %s11
    $region7: #{tpu_custom_call.1} parent=1 // loop_footer_branch
      %10 = sbr.rel target = $region3
    $region8: #{tpu_custom_call.1} parent=1 // loop_exit
      _
    %704 = vsyncpa [#allocation3], 1
    %s705 = scalar_lea.sflag [#allocation3], 1
    %706 = vsyncpa %s705, 1

</llo_original>
